<compile_context>
chip_gen: v6e
topology: v6e:2x2x1
jax: 0.10.0
libtpu: 0.0.40
codegen_flags: <defaults>
</compile_context>

<pallas_src>
import jax
import jax.numpy as jnp
from jax.experimental import pallas as pl
from jax.experimental.pallas import tpu as pltpu


def _round_up(n, m):
    return ((n + m - 1) // m) * m


def mlp_predictor_kernel(x_ref, w1_ref, b1_ref, w2_ref, b2_ref, o_ref):
    # Layer 0: Linear(input_dim -> hidden) + bias + ReLU.
    # bf16 operands to the MXU (native on all generations), f32 accumulation.
    h = jnp.dot(
        x_ref[...].astype(jnp.bfloat16),
        w1_ref[...].astype(jnp.bfloat16),
        preferred_element_type=jnp.float32,
    )                                               # (bm, hidden) f32
    h = jnp.maximum(h + b1_ref[...], 0.0)           # bias + ReLU on the VPU, f32
    # TODO(synk): F.dropout is identity in eval mode (training=False); no stochastic drop here.

    # Layer 1: Linear(hidden -> 1). Contract over hidden with w2 stored as rows (8, hidden)
    # (row 0 = w2, rows 1..7 zero), rhs-transposed contraction -> lane-dense (8, bm).
    # Producing the result with batch on the lane axis avoids a (bm,1)->(1,bm) relayout and
    # lets the store be full-width unmasked vst; the MXU is otherwise idle here.
    ys = jax.lax.dot_general(
        w2_ref[...], h,
        dimension_numbers=(((1,), (1,)), ((), ())),
        preferred_element_type=jnp.float32,
    )                                               # (8, bm), only row 0 is meaningful
    y = ys[0:1, :] + b2_ref[0, 0]                   # (1, bm); b2 scalar from SMEM
    o_ref[...] = jax.nn.sigmoid(y).astype(o_ref.dtype)


def mlp_predictor(x, w1, b1, w2, b2, *, bm=512):
    """x: (B, input_dim) float. Returns (B,) float32, matching torch.sigmoid(...).reshape(-1)."""
    B, input_dim = x.shape
    hidden_dim = w1.shape[1]

    # Choose the batch tile: big tiles amortize the ~0.35us/step pipeline overhead; for
    # small B fall back to a single (sublane-aligned) tile. Multi-tile blocks are kept
    # 128-aligned so the lane-dense output block is an exact multiple of the lane width.
    if B <= bm:
        bm_eff = _round_up(max(B, 8), 8)
    else:
        bm_eff = _round_up(bm, 128)
    B_pad = _round_up(B, bm_eff)
    num_tiles = B_pad // bm_eff

    if B_pad != B:
        x = jnp.pad(x, ((0, B_pad - B), (0, 0)))

    # Tiny params: keep untiled (constant index maps) so they stay resident across the grid.
    b1_2d = b1.reshape(1, hidden_dim).astype(jnp.float32)
    w2_rows = jnp.zeros((8, hidden_dim), jnp.float32).at[0].set(
        w2.reshape(-1).astype(jnp.float32))
    b2_2d = b2.reshape(1, 1).astype(jnp.float32)

    out = pl.pallas_call(
        mlp_predictor_kernel,
        out_shape=jax.ShapeDtypeStruct((1, B_pad), jnp.float32),
        grid_spec=pltpu.PrefetchScalarGridSpec(
            num_scalar_prefetch=0,
            grid=(num_tiles,),
            in_specs=[
                pl.BlockSpec((bm_eff, input_dim), lambda i: (i, 0)),      # x tile
                pl.BlockSpec((input_dim, hidden_dim), lambda i: (0, 0)),  # W1 (full)
                pl.BlockSpec((1, hidden_dim), lambda i: (0, 0)),          # b1 (full)
                pl.BlockSpec((8, hidden_dim), lambda i: (0, 0)),          # W2 rows (full)
                pl.BlockSpec(memory_space=pltpu.MemorySpace.SMEM),        # b2 scalar
            ],
            out_specs=pl.BlockSpec((1, bm_eff), lambda i: (0, i)),        # lane-dense row
        ),
        compiler_params=pltpu.CompilerParams(
            dimension_semantics=("parallel",),          # shards grid steps across TCs (v7x)
            vmem_limit_bytes=32 * 1024 * 1024,          # headroom for very large bm on v5e
        ),
    )(x, w1, b1_2d, w2_rows, b2_2d)

    return out.reshape(-1)[:B]


def init_params(key, input_dim, hidden_dim):
    """Deterministic init mimicking nn.Linear's U(-1/sqrt(fan_in), 1/sqrt(fan_in))."""
    k1, k2, k3, k4 = jax.random.split(key, 4)
    s1 = 1.0 / jnp.sqrt(jnp.float32(input_dim))
    s2 = 1.0 / jnp.sqrt(jnp.float32(hidden_dim))
    w1 = jax.random.uniform(k1, (input_dim, hidden_dim), jnp.float32, -s1, s1)
    b1 = jax.random.uniform(k2, (hidden_dim,), jnp.float32, -s1, s1)
    w2 = jax.random.uniform(k3, (hidden_dim, 1), jnp.float32, -s2, s2)
    b2 = jax.random.uniform(k4, (1,), jnp.float32, -s2, s2)
    return w1, b1, w2, b2


if __name__ == "__main__":
    key = jax.random.PRNGKey(0)
    kx, kp = jax.random.split(key)

    input_dim = 32   # MLP_Predictor(input_dim=32, hidden_dim=32, n_layers=2), eval mode
    hidden_dim = 32
    w1, b1, w2, b2 = init_params(kp, input_dim, hidden_dim)

    def ref_fn(xx):
        return jax.nn.sigmoid(jnp.maximum(xx @ w1 + b1, 0.0) @ w2 + b2).reshape(-1)

    # Small single-tile case (bm adapts down to the padded batch).
    x_small = jax.random.normal(kx, (16, input_dim), jnp.float32)
    out_small = mlp_predictor(x_small, w1, b1, w2, b2)
    jax.block_until_ready(out_small)
    assert out_small.shape == (16,)
    assert jnp.allclose(out_small, ref_fn(x_small), atol=5e-3)  # bf16 matmul inputs

    # Multi-tile case: exercises bm=512 tiles, batch padding, lane-dense multi-step output.
    x_big = jax.random.normal(jax.random.PRNGKey(1), (1000, input_dim), jnp.float32)
    out_big = mlp_predictor(x_big, w1, b1, w2, b2)
    jax.block_until_ready(out_big)
    assert out_big.shape == (1000,)
    assert jnp.allclose(out_big, ref_fn(x_big), atol=5e-3)

    print("KERNEL_OK")
</pallas_src>

<mosaic_0001>
module attributes {stable_mosaic.version = 11 : i64} {
  func.func @mlp_predictor_kernel(%arg0: i32, %arg1: memref<16x32xf32, #tpu.memory_space<vmem>>, %arg2: memref<32x32xf32, #tpu.memory_space<vmem>>, %arg3: memref<1x32xf32, #tpu.memory_space<vmem>>, %arg4: memref<8x32xf32, #tpu.memory_space<vmem>>, %arg5: memref<1x1xf32, #tpu.memory_space<smem>>, %arg6: memref<1x16xf32, #tpu.memory_space<vmem>>) attributes {dimension_semantics = [#tpu.dimension_semantics<parallel>], iteration_bounds = array<i64: 1>, scalar_prefetch = 0 : i64, scratch_operands = 0 : i64, tpu.core_type = #tpu.core_type<tc>, window_params = [{transform_indices = @transform_0, window_bounds = array<i64: 16, 32>}, {pipeline_mode = #tpu.pipeline_mode<synchronous>, transform_indices = @transform_1, window_bounds = array<i64: 32, 32>}, {pipeline_mode = #tpu.pipeline_mode<synchronous>, transform_indices = @transform_2, window_bounds = array<i64: 1, 32>}, {pipeline_mode = #tpu.pipeline_mode<synchronous>, transform_indices = @transform_3, window_bounds = array<i64: 8, 32>}, {transform_indices = @transform_4, window_bounds = array<i64: 1, 1>}, {transform_indices = @transform_5, window_bounds = array<i64: 1, 16>}]} {
    %c0 = arith.constant 0 : index
    %c0_0 = arith.constant 0 : index
    %0 = vector.load %arg1[%c0, %c0_0] : memref<16x32xf32, #tpu.memory_space<vmem>>, vector<16x32xf32>
    %1 = arith.truncf %0 : vector<16x32xf32> to vector<16x32xbf16>
    %c0_1 = arith.constant 0 : index
    %c0_2 = arith.constant 0 : index
    %2 = vector.load %arg2[%c0_1, %c0_2] : memref<32x32xf32, #tpu.memory_space<vmem>>, vector<32x32xf32>
    %3 = arith.truncf %2 : vector<32x32xf32> to vector<32x32xbf16>
    %cst = arith.constant dense<0.000000e+00> : vector<16x32xf32>
    %4 = tpu.matmul %1, %3, %cst {dimension_numbers = #tpu.dot_dimension_numbers<[1], [0], [0], [1], [0, 0, 1, 1], [], []>} : vector<16x32xbf16>, vector<32x32xbf16>, vector<16x32xf32> -> vector<16x32xf32>
    %c0_3 = arith.constant 0 : index
    %c0_4 = arith.constant 0 : index
    %5 = vector.load %arg3[%c0_3, %c0_4] : memref<1x32xf32, #tpu.memory_space<vmem>>, vector<1x32xf32>
    %6 = vector.broadcast %5 : vector<1x32xf32> to vector<16x32xf32>
    %7 = arith.addf %4, %6 : vector<16x32xf32>
    %cst_5 = arith.constant 0.000000e+00 : f32
    %8 = vector.broadcast %cst_5 : f32 to vector<16x32xf32>
    %9 = arith.maximumf %7, %8 : vector<16x32xf32>
    %c0_6 = arith.constant 0 : index
    %c0_7 = arith.constant 0 : index
    %10 = vector.load %arg4[%c0_6, %c0_7] : memref<8x32xf32, #tpu.memory_space<vmem>>, vector<8x32xf32>
    %cst_8 = arith.constant dense<0.000000e+00> : vector<8x16xf32>
    %11 = tpu.matmul %10, %9, %cst_8 {dimension_numbers = #tpu.dot_dimension_numbers<[1], [1], [0], [0], [0, 0, 1, 0], [], []>} : vector<8x32xf32>, vector<16x32xf32>, vector<8x16xf32> -> vector<8x16xf32>
    %12 = vector.extract_strided_slice %11 {offsets = [0, 0], sizes = [1, 16], strides = [1, 1]} : vector<8x16xf32> to vector<1x16xf32>
    %c0_9 = arith.constant 0 : index
    %c0_10 = arith.constant 0 : index
    %13 = memref.load %arg5[%c0_9, %c0_10] : memref<1x1xf32, #tpu.memory_space<smem>>
    %14 = vector.broadcast %13 : f32 to vector<1x16xf32>
    %15 = arith.addf %12, %14 : vector<1x16xf32>
    %16 = arith.negf %15 : vector<1x16xf32>
    %17 = math.exp %16 : vector<1x16xf32>
    %cst_11 = arith.constant 1.000000e+00 : f32
    %18 = vector.broadcast %cst_11 : f32 to vector<1x16xf32>
    %19 = arith.addf %18, %17 : vector<1x16xf32>
    %20 = arith.divf %18, %19 : vector<1x16xf32>
    %c0_12 = arith.constant 0 : index
    %c0_13 = arith.constant 0 : index
    %21 = vector.load %arg6[%c0_12, %c0_13] : memref<1x16xf32, #tpu.memory_space<vmem>>, vector<1x16xf32>
    tpu.vector_store %arg6[%c0_12, %c0_13], %20 {strides = array<i32>} : memref<1x16xf32, #tpu.memory_space<vmem>>, vector<1x16xf32>,
    return
  }
  func.func @transform_0(%arg0: i32) -> (i32, i32) {
    %c0_i32 = arith.constant 0 : i32
    %c0_i32_0 = arith.constant 0 : i32
    return %arg0, %c0_i32 : i32, i32
  }
  func.func @transform_1(%arg0: i32) -> (i32, i32) {
    %c0_i32 = arith.constant 0 : i32
    %c0_i32_0 = arith.constant 0 : i32
    %c0_i32_1 = arith.constant 0 : i32
    return %c0_i32, %c0_i32_0 : i32, i32
  }
  func.func @transform_2(%arg0: i32) -> (i32, i32) {
    %c0_i32 = arith.constant 0 : i32
    %c0_i32_0 = arith.constant 0 : i32
    %c0_i32_1 = arith.constant 0 : i32
    return %c0_i32, %c0_i32_0 : i32, i32
  }
  func.func @transform_3(%arg0: i32) -> (i32, i32) {
    %c0_i32 = arith.constant 0 : i32
    %c0_i32_0 = arith.constant 0 : i32
    %c0_i32_1 = arith.constant 0 : i32
    return %c0_i32, %c0_i32_0 : i32, i32
  }
  func.func @transform_4(%arg0: i32) -> (i32, i32) {
    %c0_i32 = arith.constant 0 : i32
    %c0_i32_0 = arith.constant 0 : i32
    %c0_i32_1 = arith.constant 0 : i32
    return %c0_i32, %c0_i32_0 : i32, i32
  }
  func.func @transform_5(%arg0: i32) -> (i32, i32) {
    %c0_i32 = arith.constant 0 : i32
    %c0_i32_0 = arith.constant 0 : i32
    return %c0_i32, %arg0 : i32, i32
  }
}

</mosaic_0001>

<llo_original>
// kernel: tpu_custom_call.1
$region0: #{tpu_custom_call.1}
  #allocation0 [shape = 'u32[]', space=smem, size = 0x4, offset = 0x4, fixed_abs, tag = 'smem constant byte address 0x4 - core index']
  #allocation1 [shape = 'u32[144,128]{1,0:T(1,128)}', space=vmem, size = 0x12000, scoped, tag = 'internal scratch']
  #allocation2 [shape = 'f32[1,1]{1,0:T(1,128)S(6)}', space=smem, size = 0x200, scoped, tag = 'scoped memory for tpu_custom_call.1']
  %s0 = inlined_call_operand.hbm [shape: f32[16,32], index: 0, kind: input, shape index: {}]
  %s1 = inlined_call_operand.hbm [shape: f32[32,32], index: 1, kind: input, shape index: {}]
  %s2 = inlined_call_operand.vmem [shape: f32[1,32], index: 2, kind: input, shape index: {}]
  %s3 = inlined_call_operand.hbm [shape: f32[8,32], index: 3, kind: input, shape index: {}]
  %s4 = inlined_call_operand.<no memory space> [shape: f32[1,1], index: 4, kind: input, shape index: {}]
  %s5 = inlined_call_operand.hbm [shape: f32[1,16], index: 5, kind: output, shape index: {}]
  %s6 = sld [smem:[#allocation0]]
  $region42: #{tpu_custom_call.1} parent=0
    _
  %s8 = ssub.s32 1, %s6
  %s9 = scalar_select 0, %s8, %s6
  %10 = sst [smem:[#allocation2]] %s4
  $region1: #{tpu_custom_call.1} parent=0
    #allocation3 [shape = 'u8[8192]{0}', space=vmem, size = 0x2000, scoped, tag = 'input window, operand 0, single buffered']
    #allocation4 [shape = 's32[1]{0}', space=sflag, size = 0x4, scoped, tag = 'scoped memory for tpu_custom_call.1']
    #allocation5 [shape = 's32[1]{0}', space=sflag, size = 0x4, scoped, tag = 'scoped memory for tpu_custom_call.1']
    #allocation6 [shape = 'u8[16384]{0}', space=vmem, size = 0x4000, scoped, tag = 'input window, operand 1, single buffered']
    #allocation7 [shape = 's32[1]{0}', space=sflag, size = 0x4, scoped, tag = 'scoped memory for tpu_custom_call.1']
    #allocation8 [shape = 'u8[4096]{0}', space=vmem, size = 0x1000, scoped, tag = 'input window, operand 3, single buffered']
    #allocation9 [shape = 'u8[512]{0}', space=vmem, size = 0x400, scoped, tag = 'output window, operand 0, single buffered']
    %11 = vsyncpa [#allocation4], 0
    %12 = vsyncpa [#allocation7], 0
    %13 = vsyncpa [#allocation5], 0
    // Predicated region
    $region2: #{tpu_custom_call.1} parent=1 // pred_check
      _
    $region3: #{tpu_custom_call.1} parent=1 // pred_check_branch
      %15 = sbr.rel (0) target = $region5
    $region4: #{tpu_custom_call.1} parent=1 // pred_region
      %s17 = ssub.s32 256, 256
      %18 = vsyncadd [#allocation4], %s17
      %s19 = sshll.u32 [#allocation3], 4
      %s20 = int_to_ptr.vmem [resolvable:$true] %s19
      %25 = dma.hbm_to_vmem [thread:$0]  %s0, 256, %s20, [#allocation4], 128, 128, 8
    $region5: #{tpu_custom_call.1} parent=1 // pred_fallthru
      _
    // Predicated region
    $region6: #{tpu_custom_call.1} parent=1 // pred_check
      _
    $region7: #{tpu_custom_call.1} parent=1 // pred_check_branch
      %27 = sbr.rel (0) target = $region9
    $region8: #{tpu_custom_call.1} parent=1 // pred_region
      %s29 = ssub.s32 512, 512
      %30 = vsyncadd [#allocation7], %s29
      %s31 = sshll.u32 [#allocation6], 4
      %s32 = int_to_ptr.vmem [resolvable:$true] %s31
      %37 = dma.hbm_to_vmem [thread:$0]  %s1, 512, %s32, [#allocation7], 128, 128, 8
    $region9: #{tpu_custom_call.1} parent=1 // pred_fallthru
      _
    // Predicated region
    $region10: #{tpu_custom_call.1} parent=1 // pred_check
      _
    $region11: #{tpu_custom_call.1} parent=1 // pred_check_branch
      %39 = sbr.rel (0) target = $region13
    $region12: #{tpu_custom_call.1} parent=1 // pred_region
      _
    $region13: #{tpu_custom_call.1} parent=1 // pred_fallthru
      _
    // Predicated region
    $region14: #{tpu_custom_call.1} parent=1 // pred_check
      _
    $region15: #{tpu_custom_call.1} parent=1 // pred_check_branch
      %41 = sbr.rel (0) target = $region17
    $region16: #{tpu_custom_call.1} parent=1 // pred_region
      %s43 = ssub.s32 128, 128
      %44 = vsyncadd [#allocation7], %s43
      %s46 = sshll.u32 [#allocation8], 4
      %s47 = int_to_ptr.vmem [resolvable:$true] %s46
      %49 = dma.hbm_to_vmem [thread:$0]  %s3, 128, %s47, [#allocation7]
    $region17: #{tpu_custom_call.1} parent=1 // pred_fallthru
      _
    // Predicated region
    $region18: #{tpu_custom_call.1} parent=1 // pred_check
      _
    $region19: #{tpu_custom_call.1} parent=1 // pred_check_branch
      %51 = sbr.rel (0) target = $region21
    $region20: #{tpu_custom_call.1} parent=1 // pred_region
      _
    $region21: #{tpu_custom_call.1} parent=1 // pred_fallthru
      _
    // Predicated region
    $region22: #{tpu_custom_call.1} parent=1 // pred_check
      _
    $region23: #{tpu_custom_call.1} parent=1 // pred_check_branch
      %53 = sbr.rel (0) target = $region25
    $region24: #{tpu_custom_call.1} parent=1 // pred_region
      %54 = dma.done [#allocation4], 256
    $region25: #{tpu_custom_call.1} parent=1 // pred_fallthru
      _
    // Predicated region
    $region26: #{tpu_custom_call.1} parent=1 // pred_check
      _
    $region27: #{tpu_custom_call.1} parent=1 // pred_check_branch
      %56 = sbr.rel (0) target = $region29
    $region28: #{tpu_custom_call.1} parent=1 // pred_region
      %57 = dma.done [#allocation7], 512
    $region29: #{tpu_custom_call.1} parent=1 // pred_fallthru
      _
    // Predicated region
    $region30: #{tpu_custom_call.1} parent=1 // pred_check
      _
    $region31: #{tpu_custom_call.1} parent=1 // pred_check_branch
      %59 = sbr.rel (0) target = $region33
    $region32: #{tpu_custom_call.1} parent=1 // pred_region
      %60 = dma.done [#allocation7], 128
    $region33: #{tpu_custom_call.1} parent=1 // pred_fallthru
      _
    %v62 = vld [vmem:[#allocation3] sm:$0xff]
    %v63 = vld [vmem:[#allocation3 + $0x8] sm:$0xff]
    %v64 = vpack.c.bf16 %v63, %v62
    %v65 = vld [vmem:[#allocation6] sm:$0xff]
    %v66 = vld [vmem:[#allocation6 + $0x8] sm:$0xff]
    %v67 = vld [vmem:[#allocation6 + $0x10] sm:$0xff]
    %v68 = vld [vmem:[#allocation6 + $0x18] sm:$0xff]
    %v69 = vpack.c.bf16 %v66, %v65
    %v70 = vpack.c.bf16 %v68, %v67
    %v71 = vld [vmem:[%s2] sm:$0x1]
    %v73 = vlaneseq
    %v74 = vshrl.u32 %v73, 7
    %v75 = vsub.s32 0, %v74
    %v76 = vrot.slane %v71, %v75
    %vm78 = vcmask 261120
    %v80 = vsel %vm78, %v64, 0
    %82 = vmatprep.subr.bf16.mxu0 0
    %83 = vmatpush1.bf16.msra.mxu0 0
    %84 = vmatprep.subr.bf16.mxu0 0
    %85 = vmatpush1.bf16.msra.mxu0 0
    %86 = vmatprep.subr.bf16.mxu0 0
    %87 = vmatpush1.bf16.msra.mxu0 0
    %88 = vmatprep.subr.bf16.mxu0 0
    %89 = vmatpush1.bf16.msra.mxu0 0
    %90 = vmatprep.subr.bf16.mxu0 0
    %91 = vmatpush1.bf16.msra.mxu0 0
    %92 = vmatprep.subr.bf16.mxu0 0
    %93 = vmatpush1.bf16.msra.mxu0 0
    %94 = vmatprep.subr.bf16.mxu0 0
    %95 = vmatpush1.bf16.msra.mxu0 %v70
    %96 = vmatprep.subr.bf16.mxu0 0
    %97 = vmatpush1.bf16.msra.mxu0 %v69
    %98 = vmatprep.subr.bf16.mxu0 0
    %99 = vmatpush2.bf16.msra.mxu0 0
    %100 = vmatprep.subr.bf16.mxu0 0
    %101 = vmatpush2.bf16.msra.mxu0 0
    %102 = vmatprep.subr.bf16.mxu0 0
    %103 = vmatpush2.bf16.msra.mxu0 0
    %104 = vmatprep.subr.bf16.mxu0 0
    %105 = vmatpush2.bf16.msra.mxu0 0
    %106 = vmatprep.subr.bf16.mxu0 0
    %107 = vmatpush2.bf16.msra.mxu0 0
    %108 = vmatprep.subr.bf16.mxu0 0
    %109 = vmatpush2.bf16.msra.mxu0 0
    %110 = vmatprep.subr.bf16.mxu0 0
    %111 = vmatpush2.bf16.msra.mxu0 0
    %112 = vmatprep.subr.bf16.mxu0 0
    %113 = vmatpush2.bf16.msra.mxu0 0
    %114 = vmatprep.mubr.bf16.mxu0 0
    %115 = vmatmul.mubr.bf16.gmra.mxu0 %v80
    %v116 = vpop.f32.mrf.mxu0
    %v117 = vadd.f32 %v76, %v116
    %v118 = vpop.f32.mrf.mxu0
    %v119 = vpop.f32.mrf.mxu0
    %v120 = vadd.f32 %v76, %v119
    %v121 = vpop.f32.mrf.mxu0
    %122 = vdwg.mxu0
    %v123 = vmax.f32 %v117, 0.0
    %v124 = vmax.f32 %v120, 0.0
    %v125 = vld [vmem:[#allocation8] sm:$0xff]
    %v127 = vsel %vm78, %v125, 0
    %v130 = vsel %vm78, %v123, 0
    %v133 = vsel %vm78, %v124, 0
    %135 = vmatprep.subr.mxu0 0.0
    %136 = vmatpush1.xpose.msra.mxu0 0.0
    %137 = vmatprep.subr.mxu0 0.0
    %138 = vmatpush1.xpose.msra.mxu0 0.0
    %139 = vmatprep.subr.mxu0 0.0
    %140 = vmatpush1.xpose.msra.mxu0 0.0
    %141 = vmatprep.subr.mxu0 0.0
    %142 = vmatpush1.xpose.msra.mxu0 0.0
    %143 = vmatprep.subr.mxu0 0.0
    %144 = vmatpush1.xpose.msra.mxu0 0.0
    %145 = vmatprep.subr.mxu0 0.0
    %146 = vmatpush1.xpose.msra.mxu0 0.0
    %147 = vmatprep.subr.mxu0 0.0
    %148 = vmatpush1.xpose.msra.mxu0 0.0
    %149 = vmatprep.subr.mxu0 0.0
    %150 = vmatpush1.xpose.msra.mxu0 0.0
    %151 = vmatprep.subr.mxu0 0.0
    %152 = vmatpush1.xpose.msra.mxu0 0.0
    %153 = vmatprep.subr.mxu0 0.0
    %154 = vmatpush1.xpose.msra.mxu0 0.0
    %155 = vmatprep.subr.mxu0 0.0
    %156 = vmatpush1.xpose.msra.mxu0 0.0
    %157 = vmatprep.subr.mxu0 0.0
    %158 = vmatpush1.xpose.msra.mxu0 0.0
    %159 = vmatprep.subr.mxu0 0.0
    %160 = vmatpush1.xpose.msra.mxu0 0.0
    %161 = vmatprep.subr.mxu0 0.0
    %162 = vmatpush1.xpose.msra.mxu0 0.0
    %163 = vmatprep.subr.mxu0 0.0
    %164 = vmatpush1.xpose.msra.mxu0 %v133
    %165 = vmatprep.subr.mxu0 0.0
    %166 = vmatpush1.xpose.msra.mxu0 %v130
    %167 = vmatprep.subr.mxu0 0.0
    %168 = vmatpush2.xpose.msra.mxu0 0.0
    %169 = vmatprep.subr.mxu0 0.0
    %170 = vmatpush2.xpose.msra.mxu0 0.0
    %171 = vmatprep.subr.mxu0 0.0
    %172 = vmatpush2.xpose.msra.mxu0 0.0
    %173 = vmatprep.subr.mxu0 0.0
    %174 = vmatpush2.xpose.msra.mxu0 0.0
    %175 = vmatprep.subr.mxu0 0.0
    %176 = vmatpush2.xpose.msra.mxu0 0.0
    %177 = vmatprep.subr.mxu0 0.0
    %178 = vmatpush2.xpose.msra.mxu0 0.0
    %179 = vmatprep.subr.mxu0 0.0
    %180 = vmatpush2.xpose.msra.mxu0 0.0
    %181 = vmatprep.subr.mxu0 0.0
    %182 = vmatpush2.xpose.msra.mxu0 0.0
    %183 = vmatprep.subr.mxu0 0.0
    %184 = vmatpush2.xpose.msra.mxu0 0.0
    %185 = vmatprep.subr.mxu0 0.0
    %186 = vmatpush2.xpose.msra.mxu0 0.0
    %187 = vmatprep.subr.mxu0 0.0
    %188 = vmatpush2.xpose.msra.mxu0 0.0
    %189 = vmatprep.subr.mxu0 0.0
    %190 = vmatpush2.xpose.msra.mxu0 0.0
    %191 = vmatprep.subr.mxu0 0.0
    %192 = vmatpush2.xpose.msra.mxu0 0.0
    %193 = vmatprep.subr.mxu0 0.0
    %194 = vmatpush2.xpose.msra.mxu0 0.0
    %195 = vmatprep.subr.mxu0 0.0
    %196 = vmatpush2.xpose.msra.mxu0 0.0
    %197 = vmatprep.subr.mxu0 0.0
    %198 = vmatpush2.xpose.msra.mxu0 0.0
    %199 = vmatprep.mubr.f32.mxu0 0.0
    %200 = vmatmul.mubr.f32.gmra.mxu0 %v127
    %v201 = vpop.f32.mrf.mxu0
    %v202 = vadd.f32 0.0, %v201
    %v203 = vpop.f32.mrf.mxu0
    %204 = vdwg.mxu0
    %s205 = sld [smem:[#allocation2]]
    %v206 = vstv %s205
    %v207 = vadd.f32 %v202, %v206
    %v208 = vxor.u32 %v207, 2147483648
    %v209 = vmul.f32 %v208, 1.442695
    %v210 = vpow.pop %v209
    %v211 = vadd.f32 %v210, 1.0
    %v212 = vrcp.pop %v211
    %v213 = vmul.f32 1.0, %v212
    %vm214 = vcmask 122880
    %215 = vst.msk [vmem:[#allocation9] sm:$0x1] %vm214, %v213
    // Predicated region
    $region34: #{tpu_custom_call.1} parent=1 // pred_check
      _
    $region35: #{tpu_custom_call.1} parent=1 // pred_check_branch
      %217 = sbr.rel (0) target = $region37
    $region36: #{tpu_custom_call.1} parent=1 // pred_region
      %s219 = ssub.s32 16, 16
      %220 = vsyncadd [#allocation5], %s219
      %s222 = sshll.u32 [#allocation9], 4
      %s223 = int_to_ptr.vmem [resolvable:$true] %s222
      %225 = dma.vmem_to_hbm [thread:$0]  %s223, 16, %s5, [#allocation5]
    $region37: #{tpu_custom_call.1} parent=1 // pred_fallthru
      _
    // Predicated region
    $region38: #{tpu_custom_call.1} parent=1 // pred_check
      _
    $region39: #{tpu_custom_call.1} parent=1 // pred_check_branch
      %227 = sbr.rel (0) target = $region41
    $region40: #{tpu_custom_call.1} parent=1 // pred_region
      %228 = dma.done [#allocation5], 16
    $region41: #{tpu_custom_call.1} parent=1 // pred_fallthru
      _
    %229 = vsyncpa [#allocation4], 1
    %230 = vsyncpa [#allocation7], 1
    %231 = vsyncpa [#allocation5], 1

</llo_original>
